<compile_context>
chip_gen: v5e
topology: v5e:2x2
jax: 0.10.0
libtpu: 0.0.40
codegen_flags: <defaults>
</compile_context>

<pallas_src>
import functools

import jax
import jax.numpy as jnp
from jax.experimental import pallas as pl
from jax.experimental.pallas import tpu as pltpu


def _walk_kernel(alpha_ref, w_ref, z_ref, o_ref):
    """alpha_ref: (B, A) in SMEM, w_ref: (A, D) in VMEM, z_ref/o_ref: (B, D).

    Computes o[b, :] = z[b, :] + sum_a alpha[b, a] * w[a, :] with scalar alpha
    splats (sreg -> VPU) and unrolled FMAs; A and B are tiny and static."""
    A = w_ref.shape[0]
    B = z_ref.shape[0]
    # Load each weight row once (simple sublane-offset vld from VMEM).
    w_rows = [w_ref[a:a + 1, :].astype(jnp.float32) for a in range(A)]
    for b in range(B):                       # static unroll: B is tiny
        acc = z_ref[b:b + 1, :].astype(jnp.float32)
        for a in range(A):                   # static unroll: Nsliders is tiny
            al = alpha_ref[b, a].astype(jnp.float32)   # scalar read from SMEM
            acc = acc + al * w_rows[a]                 # scalar-splat FMA (VPU)
        o_ref[b:b + 1, :] = acc.astype(o_ref.dtype)


def make_walk_linear_state(w_dict):
    """One-time parameter re-layout (outside the forward hot path).

    PyTorch layout w[name]: [1, dim_z, Nsliders]  ->  [Nsliders, dim_z]
    so the kernel reads a contiguous lane-dense (A, D) slab every call."""
    return {name: jnp.transpose(w[0], (1, 0)) for name, w in w_dict.items()}


@functools.partial(jax.jit, static_argnames=("name",), donate_argnames=("z",))
def walk_linear_forward(state, z, name, alpha, index_=None):
    """Forward of WalkLinear. `index_` is accepted but unused (as in PyTorch)."""
    del index_
    w_t = state[name]                        # [Nsliders, dim_z], pre-transposed
    B, D = z.shape
    A = alpha.shape[1]
    assert w_t.shape == (A, D)

    smem = pl.BlockSpec(memory_space=pltpu.MemorySpace.SMEM)
    vmem = pl.BlockSpec(memory_space=pltpu.MemorySpace.VMEM)
    return pl.pallas_call(
        _walk_kernel,
        out_shape=jax.ShapeDtypeStruct((B, D), z.dtype),
        in_specs=[smem, vmem, vmem],
        out_specs=vmem,
        # z is the 3rd positional input; reuse its HBM buffer for the output.
        input_output_aliases={2: 0},
    )(alpha, w_t, z)


if __name__ == "__main__":
    # Small shapes consistent with the module; dim_z kept a multiple of 128 so
    # the output slab is lane-dense.
    dim_z = 128
    Nsliders = 4
    batch = 2
    step = 3                    # stored by the PyTorch module, unused in forward
    attrList = ["smile", "age"]

    key = jax.random.PRNGKey(0)
    keys = jax.random.split(key, len(attrList) + 2)

    # nn.Parameter(np.random.normal(0.0, 0.02, [1, dim_z, Nsliders])) analogue.
    w_dict = {
        name: 0.02 * jax.random.normal(keys[i], (1, dim_z, Nsliders), jnp.float32)
        for i, name in enumerate(attrList)
    }
    z = jax.random.normal(keys[-2], (batch, dim_z), dtype=jnp.float32)
    alpha = jax.random.normal(keys[-1], (batch, Nsliders), dtype=jnp.float32)

    # One-time re-layout of the parameters (module "construction").
    state = make_walk_linear_state(w_dict)

    name = "smile"

    # Pure-JAX reference: same math as the PyTorch slider loop.  Computed
    # BEFORE the forward call because z is donated/aliased into the output.
    ref = z + jnp.einsum("bs,ds->bd", alpha, w_dict[name][0])
    ref = jax.block_until_ready(ref)

    out = walk_linear_forward(state, z, name=name, alpha=alpha)
    out = jax.block_until_ready(out)

    assert out.shape == (batch, dim_z)
    assert jnp.allclose(out, ref, rtol=1e-5, atol=1e-5), "mismatch vs reference"

    print("KERNEL_OK")
</pallas_src>

<mosaic_0001>
module attributes {stable_mosaic.version = 11 : i64} {
  func.func @_walk_kernel(%arg0: memref<2x4xf32, #tpu.memory_space<smem>>, %arg1: memref<4x128xf32, #tpu.memory_space<vmem>>, %arg2: memref<2x128xf32, #tpu.memory_space<vmem>>, %arg3: memref<2x128xf32, #tpu.memory_space<vmem>>) attributes {dimension_semantics = [], scalar_prefetch = 0 : i64, scratch_operands = 0 : i64, tpu.core_type = #tpu.core_type<tc>} {
    %c0 = arith.constant 0 : index
    %c0_0 = arith.constant 0 : index
    %0 = vector.load %arg1[%c0, %c0_0] : memref<4x128xf32, #tpu.memory_space<vmem>>, vector<1x128xf32>
    %c1 = arith.constant 1 : index
    %c0_1 = arith.constant 0 : index
    %1 = vector.load %arg1[%c1, %c0_1] : memref<4x128xf32, #tpu.memory_space<vmem>>, vector<1x128xf32>
    %c2 = arith.constant 2 : index
    %c0_2 = arith.constant 0 : index
    %2 = vector.load %arg1[%c2, %c0_2] : memref<4x128xf32, #tpu.memory_space<vmem>>, vector<1x128xf32>
    %c3 = arith.constant 3 : index
    %c0_3 = arith.constant 0 : index
    %3 = vector.load %arg1[%c3, %c0_3] : memref<4x128xf32, #tpu.memory_space<vmem>>, vector<1x128xf32>
    %c0_4 = arith.constant 0 : index
    %c0_5 = arith.constant 0 : index
    %4 = vector.load %arg2[%c0_4, %c0_5] : memref<2x128xf32, #tpu.memory_space<vmem>>, vector<1x128xf32>
    %c0_6 = arith.constant 0 : index
    %c0_7 = arith.constant 0 : index
    %5 = memref.load %arg0[%c0_6, %c0_7] : memref<2x4xf32, #tpu.memory_space<smem>>
    %6 = vector.broadcast %5 : f32 to vector<1x128xf32>
    %7 = arith.mulf %6, %0 : vector<1x128xf32>
    %8 = arith.addf %4, %7 : vector<1x128xf32>
    %c0_8 = arith.constant 0 : index
    %c1_9 = arith.constant 1 : index
    %9 = memref.load %arg0[%c0_8, %c1_9] : memref<2x4xf32, #tpu.memory_space<smem>>
    %10 = vector.broadcast %9 : f32 to vector<1x128xf32>
    %11 = arith.mulf %10, %1 : vector<1x128xf32>
    %12 = arith.addf %8, %11 : vector<1x128xf32>
    %c0_10 = arith.constant 0 : index
    %c2_11 = arith.constant 2 : index
    %13 = memref.load %arg0[%c0_10, %c2_11] : memref<2x4xf32, #tpu.memory_space<smem>>
    %14 = vector.broadcast %13 : f32 to vector<1x128xf32>
    %15 = arith.mulf %14, %2 : vector<1x128xf32>
    %16 = arith.addf %12, %15 : vector<1x128xf32>
    %c0_12 = arith.constant 0 : index
    %c3_13 = arith.constant 3 : index
    %17 = memref.load %arg0[%c0_12, %c3_13] : memref<2x4xf32, #tpu.memory_space<smem>>
    %18 = vector.broadcast %17 : f32 to vector<1x128xf32>
    %19 = arith.mulf %18, %3 : vector<1x128xf32>
    %20 = arith.addf %16, %19 : vector<1x128xf32>
    %c0_14 = arith.constant 0 : index
    %c0_15 = arith.constant 0 : index
    %21 = vector.load %arg3[%c0_14, %c0_15] : memref<2x128xf32, #tpu.memory_space<vmem>>, vector<1x128xf32>
    tpu.vector_store %arg3[%c0_14, %c0_15], %20 {strides = array<i32>} : memref<2x128xf32, #tpu.memory_space<vmem>>, vector<1x128xf32>,
    %c1_16 = arith.constant 1 : index
    %c0_17 = arith.constant 0 : index
    %22 = vector.load %arg2[%c1_16, %c0_17] : memref<2x128xf32, #tpu.memory_space<vmem>>, vector<1x128xf32>
    %c1_18 = arith.constant 1 : index
    %c0_19 = arith.constant 0 : index
    %23 = memref.load %arg0[%c1_18, %c0_19] : memref<2x4xf32, #tpu.memory_space<smem>>
    %24 = vector.broadcast %23 : f32 to vector<1x128xf32>
    %25 = arith.mulf %24, %0 : vector<1x128xf32>
    %26 = arith.addf %22, %25 : vector<1x128xf32>
    %c1_20 = arith.constant 1 : index
    %c1_21 = arith.constant 1 : index
    %27 = memref.load %arg0[%c1_20, %c1_21] : memref<2x4xf32, #tpu.memory_space<smem>>
    %28 = vector.broadcast %27 : f32 to vector<1x128xf32>
    %29 = arith.mulf %28, %1 : vector<1x128xf32>
    %30 = arith.addf %26, %29 : vector<1x128xf32>
    %c1_22 = arith.constant 1 : index
    %c2_23 = arith.constant 2 : index
    %31 = memref.load %arg0[%c1_22, %c2_23] : memref<2x4xf32, #tpu.memory_space<smem>>
    %32 = vector.broadcast %31 : f32 to vector<1x128xf32>
    %33 = arith.mulf %32, %2 : vector<1x128xf32>
    %34 = arith.addf %30, %33 : vector<1x128xf32>
    %c1_24 = arith.constant 1 : index
    %c3_25 = arith.constant 3 : index
    %35 = memref.load %arg0[%c1_24, %c3_25] : memref<2x4xf32, #tpu.memory_space<smem>>
    %36 = vector.broadcast %35 : f32 to vector<1x128xf32>
    %37 = arith.mulf %36, %3 : vector<1x128xf32>
    %38 = arith.addf %34, %37 : vector<1x128xf32>
    %c1_26 = arith.constant 1 : index
    %c0_27 = arith.constant 0 : index
    %39 = vector.load %arg3[%c1_26, %c0_27] : memref<2x128xf32, #tpu.memory_space<vmem>>, vector<1x128xf32>
    tpu.vector_store %arg3[%c1_26, %c0_27], %38 {strides = array<i32>} : memref<2x128xf32, #tpu.memory_space<vmem>>, vector<1x128xf32>,
    return
  }
}

</mosaic_0001>

<llo_original>
// kernel: walk_linear_forward.1
$region0: #{walk_linear_forward.1}
  #allocation0 [shape = 'u32[]', space=smem, size = 0x4, offset = 0x4, fixed_abs, tag = 'smem constant byte address 0x4 - core index']
  #allocation1 [shape = 'u32[72,128]{1,0:T(1,128)}', space=vmem, size = 0x9000, scoped, tag = 'internal scratch']
  %s0 = inlined_call_operand.hbm [shape: f32[2,4], index: 0, kind: input, shape index: {}]
  %s1 = inlined_call_operand.hbm [shape: f32[4,128], index: 1, kind: input, shape index: {}]
  %s2 = inlined_call_operand.hbm [shape: f32[2,128], index: 2, kind: input, shape index: {}, may-alias: {2,3}]
  %s3 = inlined_call_operand.hbm [shape: f32[2,128], index: 3, kind: output, shape index: {}, may-alias: {2,3}]
  %s4 = sld [smem:[#allocation0]]
  $region34: #{walk_linear_forward.1} parent=0
    _
  %s6 = ssub.s32 1, %s4
  %s7 = scalar_select 0, %s6, %s4
  $region1: #{walk_linear_forward.1} parent=0
    #allocation2 [shape = 'u8[1024]{0}', space=smem, size = 0x400, scoped, tag = 'input window, operand 0, single buffered']
    #allocation3 [shape = 's32[1]{0}', space=sflag, size = 0x4, scoped, tag = 'scoped memory for walk_linear_forward.1']
    #allocation4 [shape = 's32[1]{0}', space=sflag, size = 0x4, scoped, tag = 'scoped memory for walk_linear_forward.1']
    #allocation5 [shape = 's32[1]{0}', space=sflag, size = 0x4, scoped, tag = 'scoped memory for walk_linear_forward.1']
    #allocation6 [shape = 'u8[2048]{0}', space=vmem, size = 0x800, scoped, tag = 'input window, operand 1, single buffered']
    #allocation7 [shape = 'u8[1024]{0}', space=vmem, size = 0x400, scoped, tag = 'input window, operand 2, single buffered']
    #allocation8 [shape = 's32[1]{0}', space=sflag, size = 0x4, scoped, tag = 'scoped memory for walk_linear_forward.1']
    #allocation9 [shape = 'u8[1024]{0}', space=vmem, size = 0x400, scoped, tag = 'output window, operand 0, single buffered']
    %8 = vsyncpa [#allocation5], 0
    %9 = vsyncpa [#allocation3], 0
    %10 = vsyncpa [#allocation8], 0
    %11 = vsyncpa [#allocation4], 0
    // Predicated region
    $region2: #{walk_linear_forward.1} parent=1 // pred_check
      _
    $region3: #{walk_linear_forward.1} parent=1 // pred_check_branch
      %13 = sbr.rel (0) target = $region5
    $region4: #{walk_linear_forward.1} parent=1 // pred_region
      %15 = vsyncadd [#allocation5], 0
      %s17 = sshll.u32 %s0, 4
      %s18 = int_to_ptr.hbm [resolvable:$true] %s17
      %20 = dma.hbm_to_smem %s18, 32, [#allocation2], [#allocation5]
    $region5: #{walk_linear_forward.1} parent=1 // pred_fallthru
      _
    // Predicated region
    $region6: #{walk_linear_forward.1} parent=1 // pred_check
      _
    $region7: #{walk_linear_forward.1} parent=1 // pred_check_branch
      %22 = sbr.rel (0) target = $region9
    $region8: #{walk_linear_forward.1} parent=1 // pred_region
      %24 = vsyncadd [#allocation3], 0
      %s26 = sshll.u32 %s1, 4
      %s27 = int_to_ptr.hbm [resolvable:$true] %s26
      %s28 = sshll.u32 [#allocation6], 4
      %s29 = int_to_ptr.vmem [resolvable:$true] %s28
      %31 = dma.hbm_to_vmem [thread:$0]  %s27, 64, %s29, [#allocation3]
    $region9: #{walk_linear_forward.1} parent=1 // pred_fallthru
      _
    // Predicated region
    $region10: #{walk_linear_forward.1} parent=1 // pred_check
      _
    $region11: #{walk_linear_forward.1} parent=1 // pred_check_branch
      %33 = sbr.rel (0) target = $region13
    $region12: #{walk_linear_forward.1} parent=1 // pred_region
      %35 = vsyncadd [#allocation8], 0
      %s37 = sshll.u32 %s2, 4
      %s38 = int_to_ptr.hbm [resolvable:$true] %s37
      %s39 = sshll.u32 [#allocation7], 4
      %s40 = int_to_ptr.vmem [resolvable:$true] %s39
      %42 = dma.hbm_to_vmem [thread:$0]  %s38, 32, %s40, [#allocation8]
    $region13: #{walk_linear_forward.1} parent=1 // pred_fallthru
      _
    // Predicated region
    $region14: #{walk_linear_forward.1} parent=1 // pred_check
      _
    $region15: #{walk_linear_forward.1} parent=1 // pred_check_branch
      %44 = sbr.rel (0) target = $region17
    $region16: #{walk_linear_forward.1} parent=1 // pred_region
      %46 = dma.done [#allocation5], 32
    $region17: #{walk_linear_forward.1} parent=1 // pred_fallthru
      _
    // Predicated region
    $region18: #{walk_linear_forward.1} parent=1 // pred_check
      _
    $region19: #{walk_linear_forward.1} parent=1 // pred_check_branch
      %48 = sbr.rel (0) target = $region21
    $region20: #{walk_linear_forward.1} parent=1 // pred_region
      %50 = dma.done [#allocation3], 64
    $region21: #{walk_linear_forward.1} parent=1 // pred_fallthru
      _
    // Predicated region
    $region22: #{walk_linear_forward.1} parent=1 // pred_check
      _
    $region23: #{walk_linear_forward.1} parent=1 // pred_check_branch
      %52 = sbr.rel (0) target = $region25
    $region24: #{walk_linear_forward.1} parent=1 // pred_region
      %54 = dma.done [#allocation8], 32
    $region25: #{walk_linear_forward.1} parent=1 // pred_fallthru
      _
    %55 = sfence
    %v56 = vld [vmem:[#allocation6] sm:$0x1]
    %v57 = vld [vmem:[#allocation6 + $0x1] sm:$0x1]
    %v58 = vld [vmem:[#allocation6 + $0x2] sm:$0x1]
    %v59 = vld [vmem:[#allocation6 + $0x3] sm:$0x1]
    %v60 = vld [vmem:[#allocation7] sm:$0x1]
    %s61 = sld [smem:[#allocation2]]
    %v62 = vstv %s61
    %v63 = vmul.f32 %v62, %v56
    %v64 = vadd.f32 %v60, %v63
    %s65 = sld [smem:[#allocation2 + $0x1]]
    %v66 = vstv %s65
    %v67 = vmul.f32 %v66, %v57
    %v68 = vadd.f32 %v64, %v67
    %s69 = sld [smem:[#allocation2 + $0x2]]
    %v70 = vstv %s69
    %v71 = vmul.f32 %v70, %v58
    %v72 = vadd.f32 %v68, %v71
    %s73 = sld [smem:[#allocation2 + $0x3]]
    %v74 = vstv %s73
    %v75 = vmul.f32 %v74, %v59
    %v76 = vadd.f32 %v72, %v75
    %77 = vst [vmem:[#allocation9] sm:$0x1] %v76
    %v78 = vld [vmem:[#allocation7 + $0x1] sm:$0x1]
    %s79 = sld [smem:[#allocation2 + $0x80]]
    %v80 = vstv %s79
    %v81 = vmul.f32 %v80, %v56
    %v82 = vadd.f32 %v78, %v81
    %s83 = sld [smem:[#allocation2 + $0x81]]
    %v84 = vstv %s83
    %v85 = vmul.f32 %v84, %v57
    %v86 = vadd.f32 %v82, %v85
    %s87 = sld [smem:[#allocation2 + $0x82]]
    %v88 = vstv %s87
    %v89 = vmul.f32 %v88, %v58
    %v90 = vadd.f32 %v86, %v89
    %s91 = sld [smem:[#allocation2 + $0x83]]
    %v92 = vstv %s91
    %v93 = vmul.f32 %v92, %v59
    %v94 = vadd.f32 %v90, %v93
    %95 = vst [vmem:[#allocation9 + $0x1] sm:$0x1] %v94
    // Predicated region
    $region26: #{walk_linear_forward.1} parent=1 // pred_check
      _
    $region27: #{walk_linear_forward.1} parent=1 // pred_check_branch
      %97 = sbr.rel (0) target = $region29
    $region28: #{walk_linear_forward.1} parent=1 // pred_region
      %99 = vsyncadd [#allocation4], 0
      %s101 = sshll.u32 [#allocation9], 4
      %s102 = int_to_ptr.vmem [resolvable:$true] %s101
      %s103 = sshll.u32 %s3, 4
      %s104 = int_to_ptr.hbm [resolvable:$true] %s103
      %106 = dma.vmem_to_hbm [thread:$0]  %s102, 32, %s104, [#allocation4]
    $region29: #{walk_linear_forward.1} parent=1 // pred_fallthru
      _
    // Predicated region
    $region30: #{walk_linear_forward.1} parent=1 // pred_check
      _
    $region31: #{walk_linear_forward.1} parent=1 // pred_check_branch
      %108 = sbr.rel (0) target = $region33
    $region32: #{walk_linear_forward.1} parent=1 // pred_region
      %110 = dma.done [#allocation4], 32
    $region33: #{walk_linear_forward.1} parent=1 // pred_fallthru
      _
    %111 = vsyncpa [#allocation3], 1
    %112 = vsyncpa [#allocation8], 1
    %113 = vsyncpa [#allocation4], 1
    %114 = vsyncpa [#allocation5], 1

</llo_original>
